<compile_context>
chip_gen: v5e
topology: v5e:2x2
jax: 0.10.0
libtpu: 0.0.40
codegen_flags: <defaults>
</compile_context>

<pallas_src>
import math
from functools import partial

import numpy as np
import jax
import jax.numpy as jnp
from jax.experimental import pallas as pl
from jax.experimental.pallas import tpu as pltpu


# ---------------------------------------------------------------------------
# Static Cayley-Dickson algebra (trace-time numpy) == get_comp_mat(n_divs)
# ---------------------------------------------------------------------------
def _cd_conj(a):
    c = -a.copy()
    c[0] = a[0]
    return c


def _cd_mult(a, b):
    n = a.shape[0]
    if n == 1:
        return a * b
    m = n // 2
    a1, a2 = a[:m], a[m:]
    b1, b2 = b[:m], b[m:]
    # (a1, a2) * (b1, b2) = (a1*b1 - conj(b2)*a2, b2*a1 + a2*conj(b1))
    return np.concatenate([
        _cd_mult(a1, b1) - _cd_mult(_cd_conj(b2), a2),
        _cd_mult(b2, a1) + _cd_mult(a2, _cd_conj(b1)),
    ])


def get_comp_mat(n_divs=4):
    """idx[k, b], sgn[k, b]: hamilton block (k, b) = sgn[k, b] * W[idx[k, b]]."""
    idx = np.zeros((n_divs, n_divs), dtype=np.int64)
    sgn = np.zeros((n_divs, n_divs), dtype=np.float32)
    eye = np.eye(n_divs, dtype=np.float32)
    for a in range(n_divs):
        for b in range(n_divs):
            z = _cd_mult(eye[a], eye[b])
            k = int(np.argmax(np.abs(z)))
            idx[k, b] = a
            sgn[k, b] = float(np.sign(z[k]))
    return idx, sgn


def build_hamilton_t(weight, n_divs):
    """(in_features, out_features) == fast_hypercomplex(weight).T (signs folded in)."""
    idx, sgn = get_comp_mat(n_divs)
    cols = []
    for k in range(n_divs):                      # output component block
        col = jnp.concatenate(
            [sgn[k, b] * jnp.transpose(weight[int(idx[k, b])]) for b in range(n_divs)],
            axis=0)                              # (in_features, o_n)
        cols.append(col)
    return jnp.concatenate(cols, axis=1)         # (in_features, out_features)


# ---------------------------------------------------------------------------
# Tile selection (generation-aware, VMEM-budgeted)
# ---------------------------------------------------------------------------
def _round_up(x, m):
    return ((x + m - 1) // m) * m


def _sublane(dtype):
    return max(8, 32 // jnp.dtype(dtype).itemsize)   # 8 f32 / 16 bf16 / 32 int8


def _vmem_info():
    try:
        info = pltpu.get_tpu_info()
        vmem = int(getattr(info, "vmem_capacity_bytes"))
    except Exception:
        vmem = 64 << 20        # conservative (v7x-class) fallback
    vmem_limit = max(min(int(vmem * 3 // 4), 100 << 20), 32 << 20)
    return vmem, vmem_limit


def _fit_tile_m(M, target, sub):
    """Largest tile_m <= min(target, M) that satisfies the sublane rule."""
    if M >= sub:
        return max(sub, min(target, (M // sub) * sub))
    if M >= 8:
        return (M // 8) * 8
    return M                    # block dim == full array dim is always legal


def _select_tiles(K, N, dtype):
    """(tm_target, tn, tk, vmem_limit_bytes) for the tiled matmul path."""
    it = jnp.dtype(dtype).itemsize
    vmem, vmem_limit = _vmem_info()
    budget = vmem_limit - (4 << 20)

    if vmem >= (100 << 20):            # v5e / v6e class: 128 MiB VMEM, 1 TC
        tm_t = 512
        tn_t = 2048 if it <= 2 else 1024
        tk_t = 2048
        two_core = False
    else:                              # v7x class: 64 MiB VMEM, 2 TCs
        tm_t = 512
        tn_t = 1024
        tk_t = 2048 if it <= 2 else 1024
        two_core = True

    # Clamp so every block dim is <= the (unpadded) array dim it tiles.
    if N >= 128:
        tn = min(_round_up(tn_t, 128), (N // 128) * 128)
        if two_core and N >= 256:
            # keep the N grid axis >= 2 so decode shapes use both TensorCores
            tn = min(tn, max(128, _round_up(((N // 128) * 128) // 2, 128)))
    else:
        tn = N
    if K >= 128:
        tk = min(_round_up(tk_t, 128), (K // 128) * 128)
    else:
        tk = K

    sub = _sublane(dtype)
    tm = tm_t

    def working_set(tm_, tn_, tk_):
        return (2 * tm_ * tk_ * it          # x tiles   (double buffered)
                + 2 * tk_ * tn_ * it        # w tiles
                + 2 * tm_ * tn_ * it        # out tiles
                + tm_ * tn_ * 4             # f32 accumulator
                + 2 * tn_ * 4)              # bias

    for _ in range(16):                     # bounded safety-net shrink
        if working_set(tm, tn, tk) <= budget:
            break
        if tk > 128 and tk >= max(tn, 512):
            tk = max(128, _round_up(tk // 2, 128))
        elif tn > 128:
            tn = max(128, _round_up(tn // 2, 128))
        elif tm > sub:
            tm = max(sub, _round_up(tm // 2, sub))
        else:
            break
    return tm, tn, tk, vmem_limit


# ---------------------------------------------------------------------------
# One-time parameter preparation (hoisted out of the per-call forward path)
# ---------------------------------------------------------------------------
def prepare_hyperlinear_params(weight, bias, *, n_divs=4, compute_dtype=None,
                               small_m_threshold=1024):
    """Build the padded/transposed Hamilton (and compact weight) ONCE.

    The returned dict holds device arrays plus static (Python) tiling metadata;
    call hyper_linear(x, params) for the forward pass.
    """
    n_divs_w, o_n, i_n = weight.shape
    assert n_divs_w == n_divs
    in_features = i_n * n_divs
    out_features = o_n * n_divs
    compute_dtype = jnp.dtype(compute_dtype if compute_dtype is not None else weight.dtype)

    if bias is None:
        bias = jnp.zeros((out_features,), jnp.float32)
    bias = bias.astype(jnp.float32).reshape(1, out_features)

    tm_target, tn, tk, vmem_limit = _select_tiles(in_features, out_features, compute_dtype)

    hamilton_t = build_hamilton_t(weight, n_divs).astype(compute_dtype)   # (K, N)
    Kp = _round_up(in_features, tk)
    Np = _round_up(out_features, tn)
    if (Kp, Np) == (in_features, out_features):
        w_tiled = hamilton_t
    else:
        w_tiled = jnp.zeros((Kp, Np), compute_dtype).at[:in_features, :out_features].set(
            hamilton_t)
    if Np == out_features:
        b_tiled = bias
    else:
        b_tiled = jnp.zeros((1, Np), jnp.float32).at[:, :out_features].set(bias)

    # Compact (n_divs, i_n, o_n) weight for the small-M / decode path.  Avoids the
    # n_divs**2-redundant expanded-Hamilton HBM reads.  Only built when the per-component
    # blocks are lane-aligned so all in-kernel slices stay (8,128)-tile aligned.
    w_compact = None
    if (i_n % 128 == 0) and (o_n % 128 == 0):
        w_compact = jnp.transpose(weight, (0, 2, 1)).astype(compute_dtype)

    idx, sgn = get_comp_mat(n_divs)
    return dict(
        w_tiled=w_tiled, b_tiled=b_tiled, w_compact=w_compact, b_full=bias,
        in_features=in_features, out_features=out_features, n_divs=n_divs,
        i_n=i_n, o_n=o_n, idx=idx, sgn=sgn,
        tm_target=tm_target, tn=tn, tk=tk, vmem_limit=vmem_limit,
        compute_dtype=compute_dtype, small_m_threshold=small_m_threshold,
    )


# ---------------------------------------------------------------------------
# Kernel 1: general tiled (M,K)x(K,N) matmul + bias, f32 accumulation
# ---------------------------------------------------------------------------
def _tiled_matmul_kernel(x_ref, w_ref, b_ref, o_ref, acc_ref, *, k_valid, tk):
    k = pl.program_id(2)

    @pl.when(k == 0)
    def _():
        acc_ref[...] = jnp.zeros_like(acc_ref)

    x = x_ref[...]
    if k_valid % tk != 0:
        # x is NOT padded in HBM: zero the out-of-range K tail of the activation tile
        # (the weight's padded K rows are exact zeros, so the product contributes 0).
        col = jax.lax.broadcasted_iota(jnp.int32, x.shape, 1)
        x = jnp.where(col < (k_valid - k * tk), x, jnp.zeros_like(x))
    if x.dtype != w_ref.dtype:
        x = x.astype(w_ref.dtype)

    acc_ref[...] += jax.lax.dot_general(
        x, w_ref[...],
        dimension_numbers=(((1,), (0,)), ((), ())),
        preferred_element_type=jnp.float32)

    @pl.when(k == pl.num_programs(2) - 1)
    def _():
        o_ref[...] = (acc_ref[...] + b_ref[...]).astype(o_ref.dtype)


# ---------------------------------------------------------------------------
# Kernel 2: compact small-M path — weight stays VMEM-resident, signs folded into
# compile-time add/subtract, single lane-dense output store per row-tile.
# ---------------------------------------------------------------------------
def _compact_kernel(x_ref, w_ref, b_ref, o_ref, *, n_divs, i_n, idx, sgn):
    x = x_ref[...]
    if x.dtype != w_ref.dtype:
        x = x.astype(w_ref.dtype)
    cols = []
    for k in range(n_divs):
        acc = None
        for b in range(n_divs):
            a = int(idx[k, b])
            p = jnp.dot(x[:, b * i_n:(b + 1) * i_n], w_ref[a],
                        preferred_element_type=jnp.float32)
            if acc is None:
                acc = p if sgn[k, b] > 0 else -p
            else:
                acc = (acc + p) if sgn[k, b] > 0 else (acc - p)
        cols.append(acc)
    y = jnp.concatenate(cols, axis=-1) + b_ref[...]
    o_ref[...] = y.astype(o_ref.dtype)


# ---------------------------------------------------------------------------
# Forward
# ---------------------------------------------------------------------------
def hyper_linear(x, params):
    """HyperLinear.forward == F.linear(x, hamilton, bias) via Pallas TPU kernels."""
    K = params["in_features"]
    N = params["out_features"]
    *lead, k_in = x.shape
    assert k_in == K, f"expected last dim {K}, got {k_in}"

    x2 = x.reshape(-1, K)
    M = x2.shape[0]
    out_dtype = x.dtype
    it_c = jnp.dtype(params["compute_dtype"]).itemsize
    it_x = x2.dtype.itemsize
    it_o = jnp.dtype(out_dtype).itemsize
    sub = _sublane(params["compute_dtype"])
    vmem_limit = params["vmem_limit"]
    budget = vmem_limit - (4 << 20)

    # ---------------- compact (small-M, weight-VMEM-resident) path ----------------
    w_c = params["w_compact"]
    use_compact = False
    tm_c = 0
    if w_c is not None and M <= params["small_m_threshold"]:
        tm_c = _fit_tile_m(M, 256, sub)
        need = (2 * tm_c * K * it_x + 2 * w_c.size * it_c
                + 2 * tm_c * N * it_o + 2 * N * 4)
        use_compact = need <= budget

    if use_compact:
        n_divs, i_n, o_n = params["n_divs"], params["i_n"], params["o_n"]
        grid = (pl.cdiv(M, tm_c),)
        kernel = partial(_compact_kernel, n_divs=n_divs, i_n=i_n,
                         idx=params["idx"], sgn=params["sgn"])
        cost = pl.CostEstimate(
            flops=2 * M * K * N, transcendentals=0,
            bytes_accessed=int(M * K * it_x + w_c.size * it_c + N * 4 + M * N * it_o))
        out = pl.pallas_call(
            kernel,
            out_shape=jax.ShapeDtypeStruct((M, N), out_dtype),
            grid_spec=pltpu.PrefetchScalarGridSpec(
                num_scalar_prefetch=0,
                grid=grid,
                in_specs=[
                    pl.BlockSpec((tm_c, K), lambda i: (i, 0)),
                    pl.BlockSpec((n_divs, i_n, o_n), lambda i: (0, 0, 0)),
                    pl.BlockSpec((1, N), lambda i: (0, 0)),
                ],
                out_specs=pl.BlockSpec((tm_c, N), lambda i: (i, 0)),
            ),
            compiler_params=pltpu.CompilerParams(
                dimension_semantics=("parallel",),
                vmem_limit_bytes=vmem_limit),
            cost_estimate=cost,
        )(x2, w_c, params["b_full"])
        return out.reshape(*lead, N)

    # ---------------- general tiled matmul path ------------------------------------
    tn, tk = params["tn"], params["tk"]
    tm = _fit_tile_m(M, params["tm_target"], sub)
    w_p, b_p = params["w_tiled"], params["b_tiled"]
    Kp, Np = w_p.shape
    grid = (pl.cdiv(M, tm), Np // tn, Kp // tk)

    kernel = partial(_tiled_matmul_kernel, k_valid=K, tk=tk)
    cost = pl.CostEstimate(
        flops=2 * M * K * N, transcendentals=0,
        bytes_accessed=int(M * K * it_x * grid[1]        # x re-streamed per N tile
                           + Kp * Np * it_c * grid[0]    # w re-streamed per M tile
                           + Np * 4 * grid[0]
                           + M * N * it_o))

    out = pl.pallas_call(
        kernel,
        out_shape=jax.ShapeDtypeStruct((M, N), out_dtype),
        grid_spec=pltpu.PrefetchScalarGridSpec(
            num_scalar_prefetch=0,
            grid=grid,
            in_specs=[
                pl.BlockSpec((tm, tk), lambda i, j, k: (i, k)),
                pl.BlockSpec((tk, tn), lambda i, j, k: (k, j)),
                pl.BlockSpec((1, tn), lambda i, j, k: (0, j)),
            ],
            out_specs=pl.BlockSpec((tm, tn), lambda i, j, k: (i, j)),
            scratch_shapes=[pltpu.VMEM((tm, tn), jnp.float32)],
        ),
        compiler_params=pltpu.CompilerParams(
            dimension_semantics=("parallel", "parallel", "arbitrary"),
            vmem_limit_bytes=vmem_limit),
        cost_estimate=cost,
    )(x2, w_p, b_p)
    return out.reshape(*lead, N)


# ---------------------------------------------------------------------------
# Deterministic parameter init (mirrors HyperLinear.reset_parameters)
# ---------------------------------------------------------------------------
def init_hyperlinear_params(key, in_features, out_features, n_divs=4):
    o_n, i_n = out_features // n_divs, in_features // n_divs
    stdv = math.sqrt(6.0 / (o_n + i_n * n_divs))
    k_phase, k_phi, k_chi = jax.random.split(key, 3)

    phase = jax.random.uniform(k_phase, (o_n, i_n), jnp.float32,
                               minval=-np.pi, maxval=np.pi)
    phi = jax.random.uniform(k_phi, (n_divs - 1, o_n, i_n), jnp.float32,
                             minval=-1.0, maxval=1.0)
    phi = phi / jnp.sqrt((phi ** 2 + 0.0001).sum(axis=0))
    # chi(df=n_divs, scale=stdv) == stdv * sqrt(sum of n_divs squared std normals)
    normals = jax.random.normal(k_chi, (n_divs, o_n, i_n), jnp.float32)
    modulus = stdv * jnp.sqrt((normals ** 2).sum(axis=0))

    weight = jnp.stack([modulus * jnp.cos(phase)]
                       + [modulus * phi[p] * jnp.sin(phase)
                          for p in range(n_divs - 1)])       # (n_divs, o_n, i_n)
    bias = jnp.zeros((out_features,), jnp.float32)
    return weight, bias


# ---------------------------------------------------------------------------
# Pure-JAX reference (explicit hamilton matrix) for verification
# ---------------------------------------------------------------------------
def hyper_linear_reference(x, weight, bias, n_divs=4):
    idx, sgn = get_comp_mat(n_divs)
    rows = []
    for k in range(n_divs):
        rows.append(jnp.concatenate(
            [sgn[k, b] * weight[int(idx[k, b])] for b in range(n_divs)], axis=1))
    hamilton = jnp.concatenate(rows, axis=0)        # (out_features, in_features)
    return x @ hamilton.T + bias


if __name__ == "__main__":
    n_divs = 4

    # --- Test 1: tiny shapes (in=out=32), tiled path, single-block grid -------------
    key = jax.random.PRNGKey(0)
    k_param, k_x = jax.random.split(key)
    w1, b1 = init_hyperlinear_params(k_param, 32, 32, n_divs)
    p1 = prepare_hyperlinear_params(w1, b1, n_divs=n_divs)
    x1 = jax.random.normal(k_x, (2, 8, 32), jnp.float32)
    y1 = jax.block_until_ready(hyper_linear(x1, p1))
    y1_ref = hyper_linear_reference(x1, w1, b1, n_divs)
    np.testing.assert_allclose(np.asarray(y1), np.asarray(y1_ref), rtol=1e-4, atol=1e-4)
    assert y1.shape == (2, 8, 32)

    # --- Test 2: non-128-multiple K/N + ragged M: exercises in-kernel K-tail masking,
    #     multi-step K accumulation, and partial M / N output blocks ------------------
    w2, b2 = init_hyperlinear_params(jax.random.PRNGKey(1), 192, 192, n_divs)
    p2 = prepare_hyperlinear_params(w2, b2, n_divs=n_divs)
    x2 = jax.random.normal(jax.random.PRNGKey(2), (3, 37, 192), jnp.float32)
    y2 = jax.block_until_ready(hyper_linear(x2, p2))
    y2_ref = hyper_linear_reference(x2, w2, b2, n_divs)
    np.testing.assert_allclose(np.asarray(y2), np.asarray(y2_ref), rtol=5e-4, atol=5e-4)

    # --- Test 3: 128-aligned component blocks + small M: compact VMEM-resident path --
    w3, b3 = init_hyperlinear_params(jax.random.PRNGKey(3), 512, 512, n_divs)
    p3 = prepare_hyperlinear_params(w3, b3, n_divs=n_divs)
    x3 = jax.random.normal(jax.random.PRNGKey(4), (2, 8, 512), jnp.float32)
    y3 = jax.block_until_ready(hyper_linear(x3, p3))
    y3_ref = hyper_linear_reference(x3, w3, b3, n_divs)
    np.testing.assert_allclose(np.asarray(y3), np.asarray(y3_ref), rtol=5e-4, atol=5e-4)

    # --- Test 4: opt-in bf16 compute path (MXU-friendly operands, f32 accumulation) --
    w4, b4 = init_hyperlinear_params(jax.random.PRNGKey(5), 192, 192, n_divs)
    p4 = prepare_hyperlinear_params(w4, b4, n_divs=n_divs, compute_dtype=jnp.bfloat16)
    x4 = jax.random.normal(jax.random.PRNGKey(6), (2, 24, 192), jnp.float32).astype(jnp.bfloat16)
    y4 = jax.block_until_ready(hyper_linear(x4, p4))
    w4_q = w4.astype(jnp.bfloat16).astype(jnp.float32)
    y4_ref = hyper_linear_reference(x4.astype(jnp.float32), w4_q, b4, n_divs)
    np.testing.assert_allclose(np.asarray(y4, dtype=np.float32), np.asarray(y4_ref),
                               rtol=1e-2, atol=1e-2)

    print("KERNEL_OK")
</pallas_src>

<mosaic_0001>
module attributes {stable_mosaic.version = 11 : i64} {
  func.func @_tiled_matmul_kernel(%arg0: i32, %arg1: i32, %arg2: i32, %arg3: memref<16x32xf32, #tpu.memory_space<vmem>>, %arg4: memref<32x32xf32, #tpu.memory_space<vmem>>, %arg5: memref<1x32xf32, #tpu.memory_space<vmem>>, %arg6: memref<16x32xf32, #tpu.memory_space<vmem>>, %arg7: memref<16x32xf32, #tpu.memory_space<vmem>>) attributes {dimension_semantics = [#tpu.dimension_semantics<parallel>, #tpu.dimension_semantics<parallel>, #tpu.dimension_semantics<arbitrary>], iteration_bounds = array<i64: 1, 1, 1>, scalar_prefetch = 0 : i64, scratch_operands = 1 : i64, tpu.core_type = #tpu.core_type<tc>, window_params = [{transform_indices = @transform_0, window_bounds = array<i64: 16, 32>}, {transform_indices = @transform_1, window_bounds = array<i64: 32, 32>}, {transform_indices = @transform_2, window_bounds = array<i64: 1, 32>}, {transform_indices = @transform_3, window_bounds = array<i64: 16, 32>}]} {
    %c0_i32 = arith.constant 0 : i32
    %0 = arith.cmpi eq, %arg2, %c0_i32 : i32
    %1 = arith.extui %0 : i1 to i32
    %c0_i32_0 = arith.constant 0 : i32
    %2 = arith.cmpi ne, %1, %c0_i32_0 : i32
    scf.if %2 {
      %cst_10 = arith.constant 0.000000e+00 : f32
      %12 = vector.broadcast %cst_10 : f32 to vector<16x32xf32>
      %c0_11 = arith.constant 0 : index
      %c0_12 = arith.constant 0 : index
      %13 = vector.load %arg7[%c0_11, %c0_12] : memref<16x32xf32, #tpu.memory_space<vmem>>, vector<16x32xf32>
      tpu.vector_store %arg7[%c0_11, %c0_12], %12 {strides = array<i32>} : memref<16x32xf32, #tpu.memory_space<vmem>>, vector<16x32xf32>,
    } else {
    }
    %c0 = arith.constant 0 : index
    %c0_1 = arith.constant 0 : index
    %3 = vector.load %arg3[%c0, %c0_1] : memref<16x32xf32, #tpu.memory_space<vmem>>, vector<16x32xf32>
    %c0_2 = arith.constant 0 : index
    %c0_3 = arith.constant 0 : index
    %4 = vector.load %arg7[%c0_2, %c0_3] : memref<16x32xf32, #tpu.memory_space<vmem>>, vector<16x32xf32>
    %c0_4 = arith.constant 0 : index
    %c0_5 = arith.constant 0 : index
    %5 = vector.load %arg4[%c0_4, %c0_5] : memref<32x32xf32, #tpu.memory_space<vmem>>, vector<32x32xf32>
    %cst = arith.constant dense<0.000000e+00> : vector<16x32xf32>
    %6 = tpu.matmul %3, %5, %cst {dimension_numbers = #tpu.dot_dimension_numbers<[1], [0], [0], [1], [0, 0, 1, 1], [], []>} : vector<16x32xf32>, vector<32x32xf32>, vector<16x32xf32> -> vector<16x32xf32>
    %7 = arith.addf %4, %6 : vector<16x32xf32>
    %c0_6 = arith.constant 0 : index
    %c0_7 = arith.constant 0 : index
    %8 = vector.load %arg7[%c0_6, %c0_7] : memref<16x32xf32, #tpu.memory_space<vmem>>, vector<16x32xf32>
    tpu.vector_store %arg7[%c0_6, %c0_7], %7 {strides = array<i32>} : memref<16x32xf32, #tpu.memory_space<vmem>>, vector<16x32xf32>,
    %c0_i32_8 = arith.constant 0 : i32
    %9 = arith.cmpi eq, %arg2, %c0_i32_8 : i32
    %10 = arith.extui %9 : i1 to i32
    %c0_i32_9 = arith.constant 0 : i32
    %11 = arith.cmpi ne, %10, %c0_i32_9 : i32
    scf.if %11 {
      %c0_10 = arith.constant 0 : index
      %c0_11 = arith.constant 0 : index
      %12 = vector.load %arg7[%c0_10, %c0_11] : memref<16x32xf32, #tpu.memory_space<vmem>>, vector<16x32xf32>
      %c0_12 = arith.constant 0 : index
      %c0_13 = arith.constant 0 : index
      %13 = vector.load %arg5[%c0_12, %c0_13] : memref<1x32xf32, #tpu.memory_space<vmem>>, vector<1x32xf32>
      %14 = vector.broadcast %13 : vector<1x32xf32> to vector<16x32xf32>
      %15 = arith.addf %12, %14 : vector<16x32xf32>
      %c0_14 = arith.constant 0 : index
      %c0_15 = arith.constant 0 : index
      %16 = vector.load %arg6[%c0_14, %c0_15] : memref<16x32xf32, #tpu.memory_space<vmem>>, vector<16x32xf32>
      tpu.vector_store %arg6[%c0_14, %c0_15], %15 {strides = array<i32>} : memref<16x32xf32, #tpu.memory_space<vmem>>, vector<16x32xf32>,
    } else {
    }
    return
  }
  func.func @transform_0(%arg0: i32, %arg1: i32, %arg2: i32) -> (i32, i32) {
    %c0_i32 = arith.constant 0 : i32
    return %arg0, %arg2 : i32, i32
  }
  func.func @transform_1(%arg0: i32, %arg1: i32, %arg2: i32) -> (i32, i32) {
    %c0_i32 = arith.constant 0 : i32
    return %arg2, %arg1 : i32, i32
  }
  func.func @transform_2(%arg0: i32, %arg1: i32, %arg2: i32) -> (i32, i32) {
    %c0_i32 = arith.constant 0 : i32
    %c0_i32_0 = arith.constant 0 : i32
    return %c0_i32, %arg1 : i32, i32
  }
  func.func @transform_3(%arg0: i32, %arg1: i32, %arg2: i32) -> (i32, i32) {
    %c0_i32 = arith.constant 0 : i32
    return %arg0, %arg1 : i32, i32
  }
}

</mosaic_0001>

<llo_original>
// kernel: tpu_custom_call.1
$region0: #{tpu_custom_call.1}
  #allocation0 [shape = 'u32[]', space=smem, size = 0x4, offset = 0x4, fixed_abs, tag = 'smem constant byte address 0x4 - core index']
  #allocation1 [shape = 'u32[72,128]{1,0:T(1,128)}', space=vmem, size = 0x9000, scoped, tag = 'internal scratch']
  #allocation2 [shape = 'f32[16,32]{1,0:T(8,128)}', space=vmem, size = 0x2000, scoped, tag = 'scratch operand']
  %s0 = inlined_call_operand.hbm [shape: f32[16,32], index: 0, kind: input, shape index: {}]
  %s1 = inlined_call_operand.hbm [shape: f32[32,32], index: 1, kind: input, shape index: {}]
  %s2 = inlined_call_operand.vmem [shape: f32[1,32], index: 2, kind: input, shape index: {}]
  %s3 = inlined_call_operand.hbm [shape: f32[16,32], index: 3, kind: output, shape index: {}]
  %s4 = sld [smem:[#allocation0]]
  $region38: #{tpu_custom_call.1} parent=0
    _
  %s6 = ssub.s32 1, %s4
  %s7 = scalar_select 0, %s6, %s4
  $region1: #{tpu_custom_call.1} parent=0
    #allocation3 [shape = 'u8[8192]{0}', space=vmem, size = 0x2000, scoped, tag = 'input window, operand 0, single buffered']
    #allocation4 [shape = 's32[1]{0}', space=sflag, size = 0x4, scoped, tag = 'scoped memory for tpu_custom_call.1']
    #allocation5 [shape = 's32[1]{0}', space=sflag, size = 0x4, scoped, tag = 'scoped memory for tpu_custom_call.1']
    #allocation6 [shape = 'u8[16384]{0}', space=vmem, size = 0x4000, scoped, tag = 'input window, operand 1, single buffered']
    #allocation7 [shape = 's32[1]{0}', space=sflag, size = 0x4, scoped, tag = 'scoped memory for tpu_custom_call.1']
    #allocation8 [shape = 'u8[8192]{0}', space=vmem, size = 0x2000, scoped, tag = 'output window, operand 0, single buffered']
    %8 = vsyncpa [#allocation4], 0
    %9 = vsyncpa [#allocation7], 0
    %10 = vsyncpa [#allocation5], 0
    // Predicated region
    $region2: #{tpu_custom_call.1} parent=1 // pred_check
      _
    $region3: #{tpu_custom_call.1} parent=1 // pred_check_branch
      %12 = sbr.rel (0) target = $region5
    $region4: #{tpu_custom_call.1} parent=1 // pred_region
      %14 = vsyncadd [#allocation4], 0
      %s15 = sshll.u32 %s0, 4
      %s16 = int_to_ptr.hbm [resolvable:$true] %s15
      %s17 = sshll.u32 [#allocation3], 4
      %s18 = int_to_ptr.vmem [resolvable:$true] %s17
      %23 = dma.hbm_to_vmem [thread:$0]  %s16, 256, %s18, [#allocation4], 128, 128, 8
    $region5: #{tpu_custom_call.1} parent=1 // pred_fallthru
      _
    // Predicated region
    $region6: #{tpu_custom_call.1} parent=1 // pred_check
      _
    $region7: #{tpu_custom_call.1} parent=1 // pred_check_branch
      %25 = sbr.rel (0) target = $region9
    $region8: #{tpu_custom_call.1} parent=1 // pred_region
      %27 = vsyncadd [#allocation7], 0
      %s28 = sshll.u32 %s1, 4
      %s29 = int_to_ptr.hbm [resolvable:$true] %s28
      %s30 = sshll.u32 [#allocation6], 4
      %s31 = int_to_ptr.vmem [resolvable:$true] %s30
      %36 = dma.hbm_to_vmem [thread:$0]  %s29, 512, %s31, [#allocation7], 128, 128, 8
    $region9: #{tpu_custom_call.1} parent=1 // pred_fallthru
      _
    // Predicated region
    $region10: #{tpu_custom_call.1} parent=1 // pred_check
      _
    $region11: #{tpu_custom_call.1} parent=1 // pred_check_branch
      %38 = sbr.rel (0) target = $region13
    $region12: #{tpu_custom_call.1} parent=1 // pred_region
      _
    $region13: #{tpu_custom_call.1} parent=1 // pred_fallthru
      _
    // Predicated region
    $region14: #{tpu_custom_call.1} parent=1 // pred_check
      _
    $region15: #{tpu_custom_call.1} parent=1 // pred_check_branch
      %40 = sbr.rel (0) target = $region17
    $region16: #{tpu_custom_call.1} parent=1 // pred_region
      %42 = dma.done [#allocation4], 256
    $region17: #{tpu_custom_call.1} parent=1 // pred_fallthru
      _
    // Predicated region
    $region18: #{tpu_custom_call.1} parent=1 // pred_check
      _
    $region19: #{tpu_custom_call.1} parent=1 // pred_check_branch
      %44 = sbr.rel (0) target = $region21
    $region20: #{tpu_custom_call.1} parent=1 // pred_region
      %46 = dma.done [#allocation7], 512
    $region21: #{tpu_custom_call.1} parent=1 // pred_fallthru
      _
    %p47 = scmp.eq.s32.totalorder 0, 0
    // Predicated region
    $region22: #{tpu_custom_call.1} parent=1 // pred_check
      %p48 = pneg %p47
    $region23: #{tpu_custom_call.1} parent=1 // pred_check_branch
      %50 = sbr.rel (%p48) target = $region25
    $region24: #{tpu_custom_call.1} parent=1 // pred_region
      %vm51 = vcmask 261120
      %52 = vst.msk [vmem:[#allocation2] sm:$0xff] %vm51, 0.0
      %53 = vst.msk [vmem:[#allocation2 + $0x8] sm:$0xff] %vm51, 0.0
    $region25: #{tpu_custom_call.1} parent=1 // pred_fallthru
      _
    %v54 = vld [vmem:[#allocation3] sm:$0xff]
    %v55 = vld [vmem:[#allocation3 + $0x8] sm:$0xff]
    %v56 = vld [vmem:[#allocation2] sm:$0xff]
    %v57 = vld [vmem:[#allocation2 + $0x8] sm:$0xff]
    %v58 = vld [vmem:[#allocation6] sm:$0xff]
    %v59 = vld [vmem:[#allocation6 + $0x8] sm:$0xff]
    %v60 = vld [vmem:[#allocation6 + $0x10] sm:$0xff]
    %v61 = vld [vmem:[#allocation6 + $0x18] sm:$0xff]
    %vm62 = vcmask 261120
    %v64 = vsel %vm62, %v54, 0
    %v67 = vsel %vm62, %v55, 0
    %69 = vmatpush.msra.mxu0 0.0
    %70 = vmatpush.msra.mxu0 0.0
    %71 = vmatpush.msra.mxu0 0.0
    %72 = vmatpush.msra.mxu0 0.0
    %73 = vmatpush.msra.mxu0 0.0
    %74 = vmatpush.msra.mxu0 0.0
    %75 = vmatpush.msra.mxu0 0.0
    %76 = vmatpush.msra.mxu0 0.0
    %77 = vmatpush.msra.mxu0 0.0
    %78 = vmatpush.msra.mxu0 0.0
    %79 = vmatpush.msra.mxu0 0.0
    %80 = vmatpush.msra.mxu0 0.0
    %81 = vmatpush.msra.mxu0 %v61
    %82 = vmatpush.msra.mxu0 %v60
    %83 = vmatpush.msra.mxu0 %v59
    %84 = vmatpush.msra.mxu0 %v58
    %85 = vmatmul.f32.gmra.mxu0 %v64
    %v86 = vpop.f32.mrf.mxu0
    %v87 = vadd.f32 0.0, %v86
    %88 = vmatmul.f32.gmra.mxu0 %v67
    %v89 = vpop.f32.mrf.mxu0
    %v90 = vadd.f32 0.0, %v89
    %91 = vdwg.mxu0
    %v92 = vadd.f32 %v56, %v87
    %v93 = vadd.f32 %v57, %v90
    %94 = vst.msk [vmem:[#allocation2] sm:$0xff] %vm62, %v92
    %95 = vst.msk [vmem:[#allocation2 + $0x8] sm:$0xff] %vm62, %v93
    // Predicated region
    $region26: #{tpu_custom_call.1} parent=1 // pred_check
      %p96 = pneg %p47
    $region27: #{tpu_custom_call.1} parent=1 // pred_check_branch
      %98 = sbr.rel (%p96) target = $region29
    $region28: #{tpu_custom_call.1} parent=1 // pred_region
      %v99 = vld [vmem:[#allocation2] sm:$0xff]
      %v100 = vld [vmem:[#allocation2 + $0x8] sm:$0xff]
      %v101 = vld [vmem:[%s2] sm:$0x1]
      %v103 = vperm.slane %v101, 0
      %v105 = vadd.f32 %v99, %v103
      %v106 = vadd.f32 %v100, %v103
      %107 = vst.msk [vmem:[#allocation8] sm:$0xff] %vm62, %v105
      %108 = vst.msk [vmem:[#allocation8 + $0x8] sm:$0xff] %vm62, %v106
    $region29: #{tpu_custom_call.1} parent=1 // pred_fallthru
      _
    // Predicated region
    $region30: #{tpu_custom_call.1} parent=1 // pred_check
      _
    $region31: #{tpu_custom_call.1} parent=1 // pred_check_branch
      %110 = sbr.rel (0) target = $region33
    $region32: #{tpu_custom_call.1} parent=1 // pred_region
      %112 = vsyncadd [#allocation5], 0
      %s113 = sshll.u32 [#allocation8], 4
      %s114 = int_to_ptr.vmem [resolvable:$true] %s113
      %s115 = sshll.u32 %s3, 4
      %s116 = int_to_ptr.hbm [resolvable:$true] %s115
      %121 = dma.vmem_to_hbm [thread:$0]  %s114, 256, %s116, [#allocation5], 128, 128, 8
    $region33: #{tpu_custom_call.1} parent=1 // pred_fallthru
      _
    // Predicated region
    $region34: #{tpu_custom_call.1} parent=1 // pred_check
      _
    $region35: #{tpu_custom_call.1} parent=1 // pred_check_branch
      %123 = sbr.rel (0) target = $region37
    $region36: #{tpu_custom_call.1} parent=1 // pred_region
      %125 = dma.done [#allocation5], 256
    $region37: #{tpu_custom_call.1} parent=1 // pred_fallthru
      _
    %126 = vsyncpa [#allocation4], 1
    %127 = vsyncpa [#allocation7], 1
    %128 = vsyncpa [#allocation5], 1

</llo_original>
